<compile_context>
chip_gen: v6e
topology: v6e:2x2x1
jax: 0.10.0
libtpu: 0.0.40
codegen_flags: <defaults>
</compile_context>

<pallas_src>
import functools

import jax
import jax.numpy as jnp
from jax import lax
from jax.experimental import pallas as pl
from jax.experimental.pallas import tpu as pltpu

_LANE = 128
_SUBLANE = 8


def _focal_sum_kernel(pred_ref, gt_ref, out_ref, *, base_loss, beta,
                      pos_weight, n_valid, tile_rows, tiles_per_part,
                      mask_needed):
    part = pl.program_id(0)   # partition ("parallel": one per TC on v7x)
    t = pl.program_id(1)      # tile within partition (reduction axis)

    @pl.when(t == 0)
    def _init():
        out_ref[...] = jnp.zeros_like(out_ref)

    p = pred_ref[...].astype(jnp.float32)
    g = gt_ref[...].astype(jnp.float32)

    if base_loss == 'bce':
        # torch: pred = (pred+1)/2 ; gt = (gt+1)/2 before BCELoss and weight.
        p = (p + 1.0) * 0.5
        g = (g + 1.0) * 0.5
        # torch BCELoss clamps log at -100.
        logp = jnp.maximum(jnp.log(p), -100.0)
        log1mp = jnp.maximum(jnp.log(1.0 - p), -100.0)
        base = -(g * logp + (1.0 - g) * log1mp)
        diff = p - g
    else:
        diff = p - g
        ad0 = jnp.abs(diff)
        if base_loss == 'l2':
            base = diff * diff
        elif base_loss == 'smoothl1':
            base = jnp.where(ad0 < 1.0, 0.5 * diff * diff, ad0 - 0.5)
        else:  # 'l1' (default) and 'l1d' use the L1 base criterion
            base = ad0

    ad = jnp.abs(diff)
    if beta == 1.0:
        w = ad
    elif beta == 2.0:
        w = ad * ad
    else:
        w = jnp.power(ad, beta)
    if pos_weight > 1.0:
        # torch computes pos_mask on gt AFTER the bce rescale -> use g here.
        w = w * jnp.where(g > 0, jnp.float32(pos_weight), jnp.float32(1.0))

    # alpha is folded into the wrapper's final scale (factors out of the sum).
    loss = base * w

    def fold(x):
        # Fold into the vreg-shaped (1, 8, 128) accumulator (VPU-only adds).
        return x.reshape(tile_rows // _SUBLANE, _SUBLANE, _LANE).sum(
            axis=0, keepdims=True)

    if not mask_needed:
        # Element count divides the tiling exactly: no masking anywhere.
        out_ref[...] += fold(loss)
    else:
        # int32 flat indexing: fine for < 2^31 elements.
        tile_elems = tile_rows * _LANE
        flat0 = (part * tiles_per_part + t) * tile_elems
        is_full = flat0 + tile_elems <= n_valid

        @pl.when(is_full)
        def _acc_full():
            out_ref[...] += fold(loss)

        @pl.when(jnp.logical_not(is_full))
        def _acc_tail():
            # Mask elements past the logical element count: covers the
            # pad-to-chunk tail, ragged/partial last blocks, and duplicated
            # (clamped) overhang tiles of the second partition.
            row_ids = lax.broadcasted_iota(jnp.int32, (tile_rows, _LANE), 0)
            lane_ids = lax.broadcasted_iota(jnp.int32, (tile_rows, _LANE), 1)
            flat_ids = flat0 + row_ids * _LANE + lane_ids
            out_ref[...] += fold(jnp.where(flat_ids < n_valid, loss, 0.0))


def simple_focal_loss(pred, gt, *, base_loss='l1', alpha=1.0, beta=1.0,
                      pos_weight=1.0, tile_rows=8192, num_parts=2):
    """Forward pass of SimpleFocalLoss. Returns a (1,) float32 array."""
    assert pred.shape == gt.shape and pred.ndim == 5
    B, C, D, H, W = pred.shape
    n_total = B * C * D * H * W

    # Contiguous flatten — metadata-only, no transpose, no extra HBM pass.
    pred_flat = pred.reshape(-1)
    gt_flat = gt.reshape(-1)

    # Pad to a multiple of 32*128 elements so `rows` is sublane-aligned for
    # any input dtype (f32 / bf16 / fp8).  Only triggers for odd element
    # counts; padded values are masked in-kernel so they never bias the sum.
    # TODO(synk): for huge ragged inputs this jnp.pad is one extra HBM pass;
    # a manual-DMA tail path could avoid it.
    chunk = 4 * _SUBLANE * _LANE  # 4096 elements
    n_pad = pl.cdiv(n_total, chunk) * chunk
    if n_pad != n_total:
        pred_flat = jnp.pad(pred_flat, (0, n_pad - n_total))
        gt_flat = jnp.pad(gt_flat, (0, n_pad - n_total))

    rows = n_pad // _LANE                       # multiple of 32
    tile_rows = min(int(tile_rows), rows)       # multiple of 8 or == full dim
    pred2 = pred_flat.reshape(rows, _LANE)
    gt2 = gt_flat.reshape(rows, _LANE)

    tiles_total = pl.cdiv(rows, tile_rows)
    num_parts = int(num_parts) if tiles_total > 1 else 1
    tiles_per_part = pl.cdiv(tiles_total, num_parts)
    covered = num_parts * tiles_per_part * tile_rows * _LANE
    mask_needed = covered != n_total

    def in_idx(part, t):
        b = part * tiles_per_part + t
        # Clamp overhang tiles of the last partition to a valid block; the
        # in-kernel mask zeroes their contribution.
        return (jnp.minimum(b, tiles_total - 1), 0)

    kernel = functools.partial(
        _focal_sum_kernel,
        base_loss=base_loss,
        beta=float(beta),
        pos_weight=float(pos_weight),
        n_valid=n_total,
        tile_rows=tile_rows,
        tiles_per_part=tiles_per_part,
        mask_needed=bool(mask_needed),
    )

    # Explicit VMEM budget: 2 inputs x 2 buffers x tile + slack (cap for v7x).
    itemsize = max(pred2.dtype.itemsize, gt2.dtype.itemsize)
    vmem_limit = min(2 * 2 * tile_rows * _LANE * itemsize + (4 << 20), 48 << 20)

    partials = pl.pallas_call(
        kernel,
        out_shape=jax.ShapeDtypeStruct((num_parts, _SUBLANE, _LANE),
                                       jnp.float32),
        grid_spec=pltpu.PrefetchScalarGridSpec(
            num_scalar_prefetch=0,
            grid=(num_parts, tiles_per_part),
            in_specs=[
                pl.BlockSpec((tile_rows, _LANE), in_idx),
                pl.BlockSpec((tile_rows, _LANE), in_idx),
            ],
            out_specs=pl.BlockSpec((1, _SUBLANE, _LANE),
                                   lambda part, t: (part, 0, 0)),
        ),
        compiler_params=pltpu.CompilerParams(
            dimension_semantics=("parallel", "arbitrary"),
            vmem_limit_bytes=int(vmem_limit)),
    )(pred2, gt2)

    # Single cross-lane / cross-partition reduce + normalization (tiny).
    denom = float(B * C * D * H * W)
    scale = float(alpha) * ((float(W) / denom) if base_loss == 'l1d'
                            else (1.0 / denom))
    return (jnp.sum(partials) * scale).reshape(1)


def _reference(pred, gt, base_loss='l1', alpha=1.0, beta=1.0, pos_weight=1.0):
    # Pure-JAX reference mirroring the torch module.
    p = pred.astype(jnp.float32)
    g = gt.astype(jnp.float32)
    if base_loss == 'bce':
        p = (p + 1.0) / 2.0
        g = (g + 1.0) / 2.0
        base = -(g * jnp.maximum(jnp.log(p), -100.0)
                 + (1.0 - g) * jnp.maximum(jnp.log(1.0 - p), -100.0))
    elif base_loss == 'l2':
        base = (p - g) ** 2
    elif base_loss == 'smoothl1':
        d = p - g
        ad = jnp.abs(d)
        base = jnp.where(ad < 1.0, 0.5 * d * d, ad - 0.5)
    else:
        base = jnp.abs(p - g)
    w = jnp.power(jnp.abs(p - g), beta) * alpha
    if pos_weight > 1.0:
        w = w * jnp.where(g > 0, pos_weight, 1.0)
    loss = base * w
    if base_loss == 'l1d':
        per_class = jnp.sum(jnp.mean(loss, axis=(0, 2, 3)), axis=-1)
    else:
        per_class = jnp.mean(loss, axis=(0, 2, 3, 4))
    return (jnp.sum(per_class) / gt.shape[1]).reshape(1)


if __name__ == "__main__":
    key = jax.random.PRNGKey(0)
    ks = jax.random.split(key, 6)

    def check(out, ref, name):
        assert out.shape == (1,), (name, out.shape)
        assert jnp.allclose(out, ref, rtol=1e-5, atol=1e-6), (name, out, ref)

    # Test 1: default config ('l1', alpha=beta=1, pos_weight=1), even size.
    B, C, D, H, W = 2, 4, 4, 8, 16
    pred = jax.random.normal(ks[0], (B, C, D, H, W), dtype=jnp.float32)
    gt = jax.random.normal(ks[1], (B, C, D, H, W), dtype=jnp.float32)
    out = jax.block_until_ready(simple_focal_loss(pred, gt))
    check(out, jax.block_until_ready(_reference(pred, gt)), 'l1')

    # Test 2: ragged element count + small tiles -> exercises pad, partial-tile
    # masking, the pl.when full/tail split and the 2-way partition clamp.
    pr = jax.random.normal(ks[2], (1, 3, 5, 7, 11), dtype=jnp.float32)
    gr = jax.random.normal(ks[3], (1, 3, 5, 7, 11), dtype=jnp.float32)
    out = jax.block_until_ready(simple_focal_loss(pr, gr, tile_rows=8))
    check(out, jax.block_until_ready(_reference(pr, gr)), 'ragged')

    # Test 3: l2 base, beta=2, pos_weight=2.
    out = jax.block_until_ready(
        simple_focal_loss(pred, gt, base_loss='l2', beta=2.0, pos_weight=2.0))
    check(out, _reference(pred, gt, 'l2', 1.0, 2.0, 2.0), 'l2')

    # Test 4: smoothl1 base, fractional beta, alpha != 1.
    out = jax.block_until_ready(
        simple_focal_loss(pred, gt, base_loss='smoothl1', alpha=0.25, beta=0.5))
    check(out, _reference(pred, gt, 'smoothl1', 0.25, 0.5), 'smoothl1')

    # Test 5: bce base with pos_weight (inputs mapped into (-1, 1)).
    pb = jnp.tanh(jax.random.normal(ks[4], (B, C, D, H, W))) * 0.999
    gb = jnp.tanh(jax.random.normal(ks[5], (B, C, D, H, W))) * 0.999
    out = jax.block_until_ready(
        simple_focal_loss(pb, gb, base_loss='bce', pos_weight=3.0))
    check(out, _reference(pb, gb, 'bce', 1.0, 1.0, 3.0), 'bce')

    # Test 6: l1d (extra *W scale in the wrapper).
    out = jax.block_until_ready(simple_focal_loss(pred, gt, base_loss='l1d'))
    check(out, _reference(pred, gt, 'l1d'), 'l1d')

    print("KERNEL_OK")
</pallas_src>

<mosaic_0001>
module attributes {stable_mosaic.version = 11 : i64} {
  func.func @_focal_sum_kernel(%arg0: i32, %arg1: i32, %arg2: memref<32x128xf32, #tpu.memory_space<vmem>>, %arg3: memref<32x128xf32, #tpu.memory_space<vmem>>, %arg4: memref<1x8x128xf32, #tpu.memory_space<vmem>>) attributes {dimension_semantics = [#tpu.dimension_semantics<parallel>, #tpu.dimension_semantics<arbitrary>], iteration_bounds = array<i64: 1, 1>, scalar_prefetch = 0 : i64, scratch_operands = 0 : i64, tpu.core_type = #tpu.core_type<tc>, window_params = [{transform_indices = @transform_0, window_bounds = array<i64: 32, 128>}, {transform_indices = @transform_1, window_bounds = array<i64: 32, 128>}, {transform_indices = @transform_2, window_bounds = array<i64: 1, 8, 128>}]} {
    %c0_i32 = arith.constant 0 : i32
    %0 = arith.cmpi eq, %arg1, %c0_i32 : i32
    %1 = arith.extui %0 : i1 to i32
    %c0_i32_0 = arith.constant 0 : i32
    %2 = arith.cmpi ne, %1, %c0_i32_0 : i32
    scf.if %2 {
      %cst_10 = arith.constant 0.000000e+00 : f32
      %15 = vector.broadcast %cst_10 : f32 to vector<1x8x128xf32>
      %c0_11 = arith.constant 0 : index
      %c0_12 = arith.constant 0 : index
      %c0_13 = arith.constant 0 : index
      %16 = vector.load %arg4[%c0_11, %c0_12, %c0_13] : memref<1x8x128xf32, #tpu.memory_space<vmem>>, vector<1x8x128xf32>
      tpu.vector_store %arg4[%c0_11, %c0_12, %c0_13], %15 {strides = array<i32>} : memref<1x8x128xf32, #tpu.memory_space<vmem>>, vector<1x8x128xf32>,
    } else {
    }
    %c0 = arith.constant 0 : index
    %c0_1 = arith.constant 0 : index
    %3 = vector.load %arg2[%c0, %c0_1] : memref<32x128xf32, #tpu.memory_space<vmem>>, vector<32x128xf32>
    %c0_2 = arith.constant 0 : index
    %c0_3 = arith.constant 0 : index
    %4 = vector.load %arg3[%c0_2, %c0_3] : memref<32x128xf32, #tpu.memory_space<vmem>>, vector<32x128xf32>
    %5 = arith.subf %3, %4 : vector<32x128xf32>
    %6 = math.absf %5 : vector<32x128xf32>
    %7 = math.absf %5 : vector<32x128xf32>
    %8 = arith.mulf %6, %7 : vector<32x128xf32>
    %c0_4 = arith.constant 0 : index
    %c0_5 = arith.constant 0 : index
    %c0_6 = arith.constant 0 : index
    %9 = vector.load %arg4[%c0_4, %c0_5, %c0_6] : memref<1x8x128xf32, #tpu.memory_space<vmem>>, vector<1x8x128xf32>
    %10 = vector.shape_cast %8 : vector<32x128xf32> to vector<4x8x128xf32>
    %cst = arith.constant dense<0.000000e+00> : vector<8x128xf32>
    %11 = vector.multi_reduction <add>, %10, %cst [0] : vector<4x8x128xf32> to vector<8x128xf32>
    %12 = vector.shape_cast %11 : vector<8x128xf32> to vector<1x8x128xf32>
    %13 = arith.addf %9, %12 : vector<1x8x128xf32>
    %c0_7 = arith.constant 0 : index
    %c0_8 = arith.constant 0 : index
    %c0_9 = arith.constant 0 : index
    %14 = vector.load %arg4[%c0_7, %c0_8, %c0_9] : memref<1x8x128xf32, #tpu.memory_space<vmem>>, vector<1x8x128xf32>
    tpu.vector_store %arg4[%c0_7, %c0_8, %c0_9], %13 {strides = array<i32>} : memref<1x8x128xf32, #tpu.memory_space<vmem>>, vector<1x8x128xf32>,
    return
  }
  func.func @transform_0(%arg0: i32, %arg1: i32) -> (i32, i32) {
    %c1_i32 = arith.constant 1 : i32
    %0 = arith.muli %arg0, %c1_i32 : i32
    %1 = arith.addi %0, %arg1 : i32
    %c0_i32 = arith.constant 0 : i32
    %2 = arith.minsi %1, %c0_i32 : i32
    %c0_i32_0 = arith.constant 0 : i32
    %c0_i32_1 = arith.constant 0 : i32
    return %2, %c0_i32_0 : i32, i32
  }
  func.func @transform_1(%arg0: i32, %arg1: i32) -> (i32, i32) {
    %c1_i32 = arith.constant 1 : i32
    %0 = arith.muli %arg0, %c1_i32 : i32
    %1 = arith.addi %0, %arg1 : i32
    %c0_i32 = arith.constant 0 : i32
    %2 = arith.minsi %1, %c0_i32 : i32
    %c0_i32_0 = arith.constant 0 : i32
    %c0_i32_1 = arith.constant 0 : i32
    return %2, %c0_i32_0 : i32, i32
  }
  func.func @transform_2(%arg0: i32, %arg1: i32) -> (i32, i32, i32) {
    %c0_i32 = arith.constant 0 : i32
    %c0_i32_0 = arith.constant 0 : i32
    %c0_i32_1 = arith.constant 0 : i32
    return %arg0, %c0_i32, %c0_i32_0 : i32, i32, i32
  }
}

</mosaic_0001>

<llo_original>
// kernel: tpu_custom_call.1
$region0: #{tpu_custom_call.1}
  #allocation0 [shape = 'u32[]', space=smem, size = 0x4, offset = 0x4, fixed_abs, tag = 'smem constant byte address 0x4 - core index']
  #allocation1 [shape = 'u32[144,128]{1,0:T(1,128)}', space=vmem, size = 0x12000, scoped, tag = 'internal scratch']
  %s0 = inlined_call_operand.hbm [shape: f32[32,128], index: 0, kind: input, shape index: {}]
  %s1 = inlined_call_operand.hbm [shape: f32[32,128], index: 1, kind: input, shape index: {}]
  %s2 = inlined_call_operand.hbm [shape: f32[1,8,128], index: 2, kind: output, shape index: {}]
  %s3 = sld [smem:[#allocation0]]
  $region30: #{tpu_custom_call.1} parent=0
    _
  %s5 = ssub.s32 1, %s3
  %s6 = scalar_select 0, %s5, %s3
  $region1: #{tpu_custom_call.1} parent=0
    #allocation2 [shape = 'u8[16384]{0}', space=vmem, size = 0x4000, scoped, tag = 'input window, operand 0, single buffered']
    #allocation3 [shape = 's32[1]{0}', space=sflag, size = 0x4, scoped, tag = 'scoped memory for tpu_custom_call.1']
    #allocation4 [shape = 's32[1]{0}', space=sflag, size = 0x4, scoped, tag = 'scoped memory for tpu_custom_call.1']
    #allocation5 [shape = 'u8[16384]{0}', space=vmem, size = 0x4000, scoped, tag = 'input window, operand 1, single buffered']
    #allocation6 [shape = 's32[1]{0}', space=sflag, size = 0x4, scoped, tag = 'scoped memory for tpu_custom_call.1']
    #allocation7 [shape = 'u8[4096]{0}', space=vmem, size = 0x1000, scoped, tag = 'output window, operand 0, single buffered']
    %7 = vsyncpa [#allocation3], 0
    %8 = vsyncpa [#allocation6], 0
    %9 = vsyncpa [#allocation4], 0
    // Predicated region
    $region2: #{tpu_custom_call.1} parent=1 // pred_check
      _
    $region3: #{tpu_custom_call.1} parent=1 // pred_check_branch
      %11 = sbr.rel (0) target = $region5
    $region4: #{tpu_custom_call.1} parent=1 // pred_region
      %s12 = sadd.s32 0, 0
      %p13 = scmp.lt.s32.totalorder %s12, 0
      %s14 = scalar_select %p13, %s12, 0
      %s15 = smul.u32 4, %s14
      %s17 = ssub.s32 512, 512
      %18 = vsyncadd [#allocation3], %s17
      %s19 = smul.addr %s15, 128
      %s20 = scalar_lea.hbm %s0, %s19
      %s21 = sshll.u32 [#allocation2], 4
      %s22 = int_to_ptr.vmem [resolvable:$true] %s21
      %27 = dma.hbm_to_vmem [thread:$0]  %s20, 512, %s22, [#allocation3], 128, 128, 8
    $region5: #{tpu_custom_call.1} parent=1 // pred_fallthru
      _
    // Predicated region
    $region6: #{tpu_custom_call.1} parent=1 // pred_check
      _
    $region7: #{tpu_custom_call.1} parent=1 // pred_check_branch
      %29 = sbr.rel (0) target = $region9
    $region8: #{tpu_custom_call.1} parent=1 // pred_region
      %s30 = sadd.s32 0, 0
      %p31 = scmp.lt.s32.totalorder %s30, 0
      %s32 = scalar_select %p31, %s30, 0
      %s33 = smul.u32 4, %s32
      %s35 = ssub.s32 512, 512
      %36 = vsyncadd [#allocation6], %s35
      %s37 = smul.addr %s33, 128
      %s38 = scalar_lea.hbm %s1, %s37
      %s39 = sshll.u32 [#allocation5], 4
      %s40 = int_to_ptr.vmem [resolvable:$true] %s39
      %45 = dma.hbm_to_vmem [thread:$0]  %s38, 512, %s40, [#allocation6], 128, 128, 8
    $region9: #{tpu_custom_call.1} parent=1 // pred_fallthru
      _
    // Predicated region
    $region10: #{tpu_custom_call.1} parent=1 // pred_check
      _
    $region11: #{tpu_custom_call.1} parent=1 // pred_check_branch
      %47 = sbr.rel (0) target = $region13
    $region12: #{tpu_custom_call.1} parent=1 // pred_region
      %48 = dma.done [#allocation3], 512
    $region13: #{tpu_custom_call.1} parent=1 // pred_fallthru
      _
    // Predicated region
    $region14: #{tpu_custom_call.1} parent=1 // pred_check
      _
    $region15: #{tpu_custom_call.1} parent=1 // pred_check_branch
      %50 = sbr.rel (0) target = $region17
    $region16: #{tpu_custom_call.1} parent=1 // pred_region
      %51 = dma.done [#allocation6], 512
    $region17: #{tpu_custom_call.1} parent=1 // pred_fallthru
      _
    %s52 = sadd.s32 0, 0
    %p53 = scmp.lt.s32.totalorder %s52, 0
    %s54 = scalar_select %p53, %s52, 0
    %s55 = smul.u32 4, %s54
    %s56 = sadd.s32 0, 0
    %p57 = scmp.lt.s32.totalorder %s56, 0
    %s58 = scalar_select %p57, %s56, 0
    %s59 = smul.u32 4, %s58
    %p60 = scmp.eq.s32.totalorder 0, 0
    // Predicated region
    $region18: #{tpu_custom_call.1} parent=1 // pred_check
      %p61 = pneg %p60
    $region19: #{tpu_custom_call.1} parent=1 // pred_check_branch
      %63 = sbr.rel (%p61) target = $region21
    $region20: #{tpu_custom_call.1} parent=1 // pred_region
      %64 = vst [vmem:[#allocation7] sm:$0xff] 0.0
    $region21: #{tpu_custom_call.1} parent=1 // pred_fallthru
      _
    %v65 = vld [vmem:[#allocation2] sm:$0xff]
    %v66 = vld [vmem:[#allocation2 + $0x8] sm:$0xff]
    %v67 = vld [vmem:[#allocation2 + $0x10] sm:$0xff]
    %v68 = vld [vmem:[#allocation2 + $0x18] sm:$0xff]
    %v69 = vld [vmem:[#allocation5] sm:$0xff]
    %v70 = vld [vmem:[#allocation5 + $0x8] sm:$0xff]
    %v71 = vld [vmem:[#allocation5 + $0x10] sm:$0xff]
    %v72 = vld [vmem:[#allocation5 + $0x18] sm:$0xff]
    %v73 = vsub.f32 %v65, %v69
    %v74 = vsub.f32 %v66, %v70
    %v75 = vsub.f32 %v67, %v71
    %v76 = vsub.f32 %v68, %v72
    %v77 = vand.u32 2147483647, %v73
    %v78 = vand.u32 2147483647, %v74
    %v79 = vand.u32 2147483647, %v75
    %v80 = vand.u32 2147483647, %v76
    %v81 = vmul.f32 %v77, %v77
    %v82 = vmul.f32 %v78, %v78
    %v83 = vmul.f32 %v79, %v79
    %v84 = vmul.f32 %v80, %v80
    %v85 = vld [vmem:[#allocation7] sm:$0xff]
    %v86 = vadd.f32 %v81, %v82
    %v87 = vadd.f32 %v86, %v83
    %v88 = vadd.f32 %v87, %v84
    %v89 = vadd.f32 %v85, %v88
    %90 = vst [vmem:[#allocation7] sm:$0xff] %v89
    // Predicated region
    $region22: #{tpu_custom_call.1} parent=1 // pred_check
      _
    $region23: #{tpu_custom_call.1} parent=1 // pred_check_branch
      %92 = sbr.rel (0) target = $region25
    $region24: #{tpu_custom_call.1} parent=1 // pred_region
      %s94 = ssub.s32 128, 128
      %95 = vsyncadd [#allocation4], %s94
      %s97 = sshll.u32 [#allocation7], 4
      %s98 = int_to_ptr.vmem [resolvable:$true] %s97
      %100 = dma.vmem_to_hbm [thread:$0]  %s98, 128, %s2, [#allocation4]
    $region25: #{tpu_custom_call.1} parent=1 // pred_fallthru
      _
    // Predicated region
    $region26: #{tpu_custom_call.1} parent=1 // pred_check
      _
    $region27: #{tpu_custom_call.1} parent=1 // pred_check_branch
      %102 = sbr.rel (0) target = $region29
    $region28: #{tpu_custom_call.1} parent=1 // pred_region
      %103 = dma.done [#allocation4], 128
    $region29: #{tpu_custom_call.1} parent=1 // pred_fallthru
      _
    %104 = vsyncpa [#allocation3], 1
    %105 = vsyncpa [#allocation6], 1
    %106 = vsyncpa [#allocation4], 1

</llo_original>
